<compile_context>
chip_gen: v5e
topology: v5e:2x2
jax: 0.10.0
libtpu: 0.0.40
codegen_flags: <defaults>
</compile_context>

<pallas_src>
import jax
import jax.numpy as jnp
from jax.experimental import pallas as pl
from jax.experimental.pallas import tpu as pltpu


def _round_up(x, m):
    return (x + m - 1) // m * m


# --------------------------------------------------------------------------
# Kernel 1: target prep — tgt_nT = l2_normalize(target).T   (bf16 output)
# --------------------------------------------------------------------------
def _target_prep_kernel(tgt_ref, out_ref):
    t = tgt_ref[...]                                                   # (T, C) f32
    # 1/max(||t||, 1e-12) == rsqrt(max(sum(t^2), 1e-24))  (matches F.normalize)
    inv = jax.lax.rsqrt(jnp.maximum(jnp.sum(t * t, axis=-1, keepdims=True), 1e-24))
    out_ref[...] = (t * inv).T.astype(out_ref.dtype)                   # (C, T) bf16


# --------------------------------------------------------------------------
# Kernel 2: main combiner — MLP (cached per i-tile) + logits tile
# --------------------------------------------------------------------------
def _combiner_kernel(
    scale_ref,                      # scalar prefetch: exp(logit_scale), shape (1,) f32
    img_ref, txt_ref, tgtT_ref,
    w_img_ref, b_img_ref, w_txt_ref, b_txt_ref,
    w1a_ref, w1b_ref, b1_ref,
    w2_ref, b2_ref,
    w3_ref, b3_ref,
    w_out_ref, b_out_ref,
    out_ref,
    pred_ref,                       # VMEM scratch (T_i, CLIPp) bf16
):
    f32 = jnp.float32
    bdt = w1a_ref.dtype             # bfloat16 matmul chain

    @pl.when(pl.program_id(1) == 0)
    def _compute_pred():
        # projections + ReLU (bf16 MXU, f32 accumulation / bias / ReLU)
        img_p = jnp.maximum(
            jnp.dot(img_ref[...], w_img_ref[...], preferred_element_type=f32)
            + b_img_ref[...], 0.0).astype(bdt)
        txt_p = jnp.maximum(
            jnp.dot(txt_ref[...], w_txt_ref[...], preferred_element_type=f32)
            + b_txt_ref[...], 0.0).astype(bdt)

        # concat([img_p, txt_p]) @ W1  done as exact split matmul
        h = jnp.maximum(
            jnp.dot(img_p, w1a_ref[...], preferred_element_type=f32)
            + jnp.dot(txt_p, w1b_ref[...], preferred_element_type=f32)
            + b1_ref[...], 0.0).astype(bdt)

        # MLP layers 2, 3 (dropout = identity in eval mode)
        h = jnp.maximum(
            jnp.dot(h, w2_ref[...], preferred_element_type=f32) + b2_ref[...],
            0.0).astype(bdt)
        h = jnp.maximum(
            jnp.dot(h, w3_ref[...], preferred_element_type=f32) + b3_ref[...],
            0.0).astype(bdt)

        # output layer + L2 normalize (f32); fold exp(logit_scale) into pred,
        # then cache as bf16 for the single-pass MXU logits GEMM.
        out = jnp.dot(h, w_out_ref[...], preferred_element_type=f32) + b_out_ref[...]
        inv = jax.lax.rsqrt(
            jnp.maximum(jnp.sum(out * out, axis=-1, keepdims=True), 1e-24))
        pred_ref[...] = (scale_ref[0] * out * inv).astype(pred_ref.dtype)

    # inner loop: one lane-dense bf16 MXU matmul (f32 accumulate) per (i, j) tile
    out_ref[...] = jnp.dot(pred_ref[...], tgtT_ref[...],
                           preferred_element_type=jnp.float32)


# --------------------------------------------------------------------------
# Wrapper helpers
# --------------------------------------------------------------------------
def _prepare_params(params, clip_dim, proj_dim, hidden_dim):
    """Zero-pad feature dims to multiples of 128; weights -> bf16, biases -> f32."""
    CLIPp = _round_up(clip_dim, 128)
    PROJp = _round_up(proj_dim, 128)
    HIDp = _round_up(hidden_dim, 128)

    def pw(w, r, c):
        return jnp.pad(w, ((0, r - w.shape[0]), (0, c - w.shape[1]))).astype(jnp.bfloat16)

    def pb(b, c):
        return jnp.pad(b, ((0, 0), (0, c - b.shape[1]))).astype(jnp.float32)

    pp = {
        "w_img": pw(params["w_img"], CLIPp, PROJp), "b_img": pb(params["b_img"], PROJp),
        "w_txt": pw(params["w_txt"], CLIPp, PROJp), "b_txt": pb(params["b_txt"], PROJp),
        "w1a": pw(params["w1a"], PROJp, HIDp),
        "w1b": pw(params["w1b"], PROJp, HIDp),
        "b1": pb(params["b1"], HIDp),
        "w2": pw(params["w2"], HIDp, HIDp), "b2": pb(params["b2"], HIDp),
        "w3": pw(params["w3"], HIDp, HIDp), "b3": pb(params["b3"], HIDp),
        "w_out": pw(params["w_out"], HIDp, CLIPp), "b_out": pb(params["b_out"], CLIPp),
        # exp() folded into the wrapper; kernel only sees the ready scale.
        "scale": jnp.exp(params["logit_scale"]).astype(jnp.float32),
    }
    return pp, (CLIPp, PROJp, HIDp)


def _pick_tiles(B):
    """Decoupled row/column tiles; keeps n_i even for v7x megacore sharding."""
    B8 = _round_up(B, 8)
    if B8 <= 128:
        return B8, B8, B8                 # single tile, block == full dim
    if B <= 1024:
        T_i, T_j = 128, 256
    else:
        T_i, T_j = 256, 512
    B_pad = _round_up(B, max(T_i, T_j))   # T_i divides T_j
    return T_i, T_j, B_pad


def _vmem_limit_bytes():
    """~100 MiB on 128-MiB-VMEM chips, ~56 MiB on v7x's 64-MiB-per-core VMEM."""
    try:
        cap = int(pltpu.get_tpu_info().vmem_capacity_bytes)
    except Exception:
        cap = 128 * 1024 * 1024
    return int(min(100 * 1024 * 1024, (cap * 7) // 8))


# --------------------------------------------------------------------------
# Forward
# --------------------------------------------------------------------------
def deep_mlp_combiner_forward(image_features, text_features, target_features, params):
    B, clip_dim = image_features.shape
    proj_dim = params["w_img"].shape[1]
    hidden_dim = params["w2"].shape[0]

    pp, (CLIPp, PROJp, HIDp) = _prepare_params(params, clip_dim, proj_dim, hidden_dim)
    T_i, T_j, B_pad = _pick_tiles(B)
    vmem_limit = _vmem_limit_bytes()

    def pad_feat(x, dtype):
        return jnp.pad(x, ((0, B_pad - B), (0, CLIPp - clip_dim))).astype(dtype)

    img = pad_feat(image_features, jnp.bfloat16)
    txt = pad_feat(text_features, jnp.bfloat16)
    tgt = pad_feat(target_features, jnp.float32)

    # ---- prep kernel: (CLIPp, B_pad) normalized + transposed target, bf16
    tgt_nT = pl.pallas_call(
        _target_prep_kernel,
        out_shape=jax.ShapeDtypeStruct((CLIPp, B_pad), jnp.bfloat16),
        grid=(B_pad // T_j,),
        in_specs=[pl.BlockSpec((T_j, CLIPp), lambda b: (b, 0))],
        out_specs=pl.BlockSpec((CLIPp, T_j), lambda b: (0, b)),
        compiler_params=pltpu.CompilerParams(
            dimension_semantics=("parallel",),
            vmem_limit_bytes=vmem_limit),
    )(tgt)

    # ---- main kernel
    n_i = B_pad // T_i
    n_j = B_pad // T_j

    def run(single_buffer_weights):
        # Resident (weight/bias) blocks: constant index_map; single-buffered
        # when supported (never re-fetched, so double buffering only wastes VMEM).
        if single_buffer_weights:
            rep_kwargs = dict(pipeline_mode=pl.Buffered(1))
        else:
            rep_kwargs = {}

        def rep(shape):
            return pl.BlockSpec(shape, lambda i, j, s: (0, 0), **rep_kwargs)

        grid_spec = pltpu.PrefetchScalarGridSpec(
            num_scalar_prefetch=1,          # exp(logit_scale)
            grid=(n_i, n_j),
            in_specs=[
                pl.BlockSpec((T_i, CLIPp), lambda i, j, s: (i, 0)),   # image (bf16)
                pl.BlockSpec((T_i, CLIPp), lambda i, j, s: (i, 0)),   # text  (bf16)
                pl.BlockSpec((CLIPp, T_j), lambda i, j, s: (0, j)),   # tgt_nT (bf16)
                rep((CLIPp, PROJp)), rep((1, PROJp)),                 # w_img, b_img
                rep((CLIPp, PROJp)), rep((1, PROJp)),                 # w_txt, b_txt
                rep((PROJp, HIDp)), rep((PROJp, HIDp)), rep((1, HIDp)),  # w1a, w1b, b1
                rep((HIDp, HIDp)), rep((1, HIDp)),                    # w2, b2
                rep((HIDp, HIDp)), rep((1, HIDp)),                    # w3, b3
                rep((HIDp, CLIPp)), rep((1, CLIPp)),                  # w_out, b_out
            ],
            out_specs=pl.BlockSpec((T_i, T_j), lambda i, j, s: (i, j)),
            scratch_shapes=[pltpu.VMEM((T_i, CLIPp), jnp.bfloat16)],  # cached pred
        )

        return pl.pallas_call(
            _combiner_kernel,
            out_shape=jax.ShapeDtypeStruct((B_pad, B_pad), jnp.float32),
            grid_spec=grid_spec,
            compiler_params=pltpu.CompilerParams(
                dimension_semantics=("parallel", "arbitrary"),
                vmem_limit_bytes=vmem_limit),
        )(pp["scale"], img, txt, tgt_nT,
          pp["w_img"], pp["b_img"], pp["w_txt"], pp["b_txt"],
          pp["w1a"], pp["w1b"], pp["b1"],
          pp["w2"], pp["b2"], pp["w3"], pp["b3"],
          pp["w_out"], pp["b_out"])

    try:
        logits = run(True)
    except Exception:
        # Fallback for JAX builds that reject pipeline_mode=pl.Buffered(1).
        logits = run(False)

    return logits[:B, :B]


# --------------------------------------------------------------------------
# Parameters + reference
# --------------------------------------------------------------------------
def init_params(key, clip_dim, proj_dim, hidden_dim):
    """Deterministic synthetic parameters, stored as [in_dim, out_dim]."""
    ks = jax.random.split(key, 6)

    def lin(k, fan_in, fan_out):
        kw, kb = jax.random.split(k)
        w = jax.random.normal(kw, (fan_in, fan_out), jnp.float32) * 0.05
        b = jax.random.normal(kb, (1, fan_out), jnp.float32) * 0.05
        return w, b

    w_img, b_img = lin(ks[0], clip_dim, proj_dim)
    w_txt, b_txt = lin(ks[1], clip_dim, proj_dim)
    w1, b1 = lin(ks[2], 2 * proj_dim, hidden_dim)
    w2, b2 = lin(ks[3], hidden_dim, hidden_dim)
    w3, b3 = lin(ks[4], hidden_dim, hidden_dim)
    w_out, b_out = lin(ks[5], hidden_dim, clip_dim)

    return {
        "w_img": w_img, "b_img": b_img,
        "w_txt": w_txt, "b_txt": b_txt,
        # split W1 into the image-half / text-half of the concatenated input
        "w1a": w1[:proj_dim], "w1b": w1[proj_dim:], "b1": b1,
        "w2": w2, "b2": b2,
        "w3": w3, "b3": b3,
        "w_out": w_out, "b_out": b_out,
        "logit_scale": jnp.array([jnp.log(1.0 / 0.07)], jnp.float32),
    }


def reference_forward(image_features, text_features, target_features, p):
    """Pure-JAX reference mirroring the kernel's bf16-matmul / f32-accumulate path."""
    bf16, f32 = jnp.bfloat16, jnp.float32

    def mm(x, w):
        return jnp.dot(x.astype(bf16), w.astype(bf16), preferred_element_type=f32)

    img_p = jax.nn.relu(mm(image_features, p["w_img"]) + p["b_img"])
    txt_p = jax.nn.relu(mm(text_features, p["w_txt"]) + p["b_txt"])
    h = jax.nn.relu(mm(img_p, p["w1a"]) + mm(txt_p, p["w1b"]) + p["b1"])
    h = jax.nn.relu(mm(h, p["w2"]) + p["b2"])
    h = jax.nn.relu(mm(h, p["w3"]) + p["b3"])
    out = mm(h, p["w_out"]) + p["b_out"]

    pred = out * jax.lax.rsqrt(
        jnp.maximum(jnp.sum(out * out, axis=-1, keepdims=True), 1e-24))
    tgt = target_features.astype(f32)
    tgt_n = tgt * jax.lax.rsqrt(
        jnp.maximum(jnp.sum(tgt * tgt, axis=-1, keepdims=True), 1e-24))
    scale = jnp.exp(p["logit_scale"][0])
    # Final GEMM mirrors the kernel: bf16 operands, f32 accumulation.
    return jnp.dot((scale * pred).astype(bf16), tgt_n.astype(bf16).T,
                   preferred_element_type=f32)


if __name__ == "__main__":
    # Small dims consistent with the module; B=300 exercises padding plus a
    # (4, 2) grid with decoupled T_i=128 / T_j=256 tiles.
    B, CLIP, PROJ, HID = 300, 32, 16, 32

    key = jax.random.PRNGKey(0)
    k_img, k_txt, k_tgt, k_par = jax.random.split(key, 4)

    image_features = jax.random.normal(k_img, (B, CLIP), jnp.float32)
    text_features = jax.random.normal(k_txt, (B, CLIP), jnp.float32)
    target_features = jax.random.normal(k_tgt, (B, CLIP), jnp.float32)
    params = init_params(k_par, CLIP, PROJ, HID)

    logits = deep_mlp_combiner_forward(
        image_features, text_features, target_features, params)
    jax.block_until_ready(logits)

    ref = reference_forward(image_features, text_features, target_features, params)
    assert logits.shape == (B, B)
    assert jnp.allclose(logits, ref, atol=5e-2, rtol=5e-2), \
        float(jnp.max(jnp.abs(logits - ref)))

    print("KERNEL_OK")
</pallas_src>

<mosaic_0001>
module attributes {stable_mosaic.version = 11 : i64} {
  func.func @_target_prep_kernel(%arg0: i32, %arg1: memref<256x128xf32, #tpu.memory_space<vmem>>, %arg2: memref<128x256xbf16, #tpu.memory_space<vmem>>) attributes {dimension_semantics = [#tpu.dimension_semantics<parallel>], iteration_bounds = array<i64: 2>, scalar_prefetch = 0 : i64, scratch_operands = 0 : i64, tpu.core_type = #tpu.core_type<tc>, window_params = [{transform_indices = @transform_0, window_bounds = array<i64: 256, 128>}, {transform_indices = @transform_1, window_bounds = array<i64: 128, 256>}]} {
    %c0 = arith.constant 0 : index
    %c0_0 = arith.constant 0 : index
    %0 = vector.load %arg1[%c0, %c0_0] : memref<256x128xf32, #tpu.memory_space<vmem>>, vector<256x128xf32>
    %1 = arith.mulf %0, %0 : vector<256x128xf32>
    %cst = arith.constant dense<0.000000e+00> : vector<256xf32>
    %2 = vector.multi_reduction <add>, %1, %cst [1] : vector<256x128xf32> to vector<256xf32>
    %3 = vector.shape_cast %2 : vector<256xf32> to vector<256x1xf32>
    %cst_1 = arith.constant 1.000000e-24 : f32
    %4 = vector.broadcast %cst_1 : f32 to vector<256x1xf32>
    %5 = arith.maximumf %3, %4 : vector<256x1xf32>
    %6 = math.rsqrt %5 : vector<256x1xf32>
    %7 = vector.broadcast %6 : vector<256x1xf32> to vector<256x128xf32>
    %8 = arith.mulf %0, %7 : vector<256x128xf32>
    %9 = tpu.transpose %8, [1, 0] : vector<256x128xf32> -> vector<128x256xf32>
    %10 = arith.truncf %9 : vector<128x256xf32> to vector<128x256xbf16>
    %c0_2 = arith.constant 0 : index
    %c0_3 = arith.constant 0 : index
    %11 = vector.load %arg2[%c0_2, %c0_3] : memref<128x256xbf16, #tpu.memory_space<vmem>>, vector<128x256xbf16>
    tpu.vector_store %arg2[%c0_2, %c0_3], %10 {strides = array<i32>} : memref<128x256xbf16, #tpu.memory_space<vmem>>, vector<128x256xbf16>,
    return
  }
  func.func @transform_0(%arg0: i32) -> (i32, i32) {
    %c0_i32 = arith.constant 0 : i32
    %c0_i32_0 = arith.constant 0 : i32
    return %arg0, %c0_i32 : i32, i32
  }
  func.func @transform_1(%arg0: i32) -> (i32, i32) {
    %c0_i32 = arith.constant 0 : i32
    %c0_i32_0 = arith.constant 0 : i32
    return %c0_i32, %arg0 : i32, i32
  }
}

</mosaic_0001>

<llo_original>
// kernel: tpu_custom_call.1
$region0: #{tpu_custom_call.1}
  #allocation0 [shape = 'u32[]', space=smem, size = 0x4, offset = 0x4, fixed_abs, tag = 'smem constant byte address 0x4 - core index']
  #allocation1 [shape = 'u32[72,128]{1,0:T(1,128)}', space=vmem, size = 0x9000, scoped, tag = 'internal scratch']
  %s0 = inlined_call_operand.hbm [shape: f32[512,128], index: 0, kind: input, shape index: {}]
  %s1 = inlined_call_operand.hbm [shape: bf16[128,512], index: 1, kind: output, shape index: {}]
  %s2 = sld [smem:[#allocation0]]
  $region41: #{tpu_custom_call.1} parent=0
    _
  %s4 = ssub.s32 1, %s2
  %s5 = scalar_select 0, %s4, %s2
  $region1: #{tpu_custom_call.1} parent=0
    #allocation2 [shape = 'u8[262144]{0}', space=vmem, size = 0x40000, scoped, tag = 'input window, operand 0']
    #allocation3 [shape = 's32[2]{0}', space=sflag, size = 0x8, scoped, tag = 'scoped memory for tpu_custom_call.1']
    #allocation4 [shape = 's32[2]{0}', space=sflag, size = 0x8, scoped, tag = 'scoped memory for tpu_custom_call.1']
    #allocation5 [shape = 'u8[131072]{0}', space=vmem, size = 0x20000, scoped, tag = 'output window, operand 0']
    %6 = vsyncpa [#allocation3], 0
    %s7 = scalar_lea.sflag [#allocation3], 1
    %8 = vsyncpa %s7, 0
    %9 = vsyncpa [#allocation4], 0
    %s10 = scalar_lea.sflag [#allocation4], 1
    %11 = vsyncpa %s10, 0
    loop: start=0, step=1, limit=4
    $region2: #{tpu_custom_call.1} parent=1 // loop_pre_header
      _
    $region3: #{tpu_custom_call.1} parent=1 // loop_header
      %s13 = sphi 0, %s17
      %p14 = scmp.ge.s32.totalorder %s13, 4
      %s23 = sphi 0, %s25
      %s26 = sphi 0, %s23
      %s27 = sphi 0, %s26
      %s43 = sphi 0, %s27
      %s49 = sphi 0, %s51
      %s52 = sphi 0, %s49
      %s53 = sphi 0, %s52
      %s69 = sphi 0, %s53
    $region4: #{tpu_custom_call.1} parent=1 // loop_header_branch
      %16 = sbr.rel (%p14) target = $region8
    $region5: #{tpu_custom_call.1} parent=1 // loop_body
      %s18 = ssub.s32 %s13, 1
      %s19 = ssub.s32 %s13, 2
      %s20 = sadd.s32 %s13, 1
      %s21 = ssub.s32 %s13, %s20
      %p22 = scmp.eq.s32.totalorder %s21, 0
      %s24 = sadd.s32 %s23, 1
      %s25 = scalar_select %p22, %s23, %s24
      %p28 = pneg %p22
      %p29 = scmp.eq.s32.totalorder %s13, 1
      %p30 = por %p28, %p29
      %p31 = scmp.ne.s32.totalorder %s23, %s26
      %p32 = scmp.eq.s32.totalorder %s13, 0
      %p33 = por %p31, %p32
      %p34 = scmp.ne.s32.totalorder %s23, %s26
      %p35 = scmp.eq.s32.totalorder %s18, 1
      %p36 = por %p34, %p35
      %p37 = scmp.ne.s32.totalorder %s26, %s27
      %p38 = scmp.eq.s32.totalorder %s18, 0
      %p39 = por %p37, %p38
      %p40 = scmp.ne.s32.totalorder %s26, %s27
      %p41 = scmp.eq.s32.totalorder %s19, 1
      %p42 = por %p40, %p41
      %p44 = scmp.ne.s32.totalorder %s27, %s43
      %p45 = scmp.eq.s32.totalorder %s19, 0
      %p46 = por %p44, %p45
      %s47 = ssub.s32 %s13, %s20
      %p48 = scmp.eq.s32.totalorder %s47, 0
      %s50 = sadd.s32 %s49, 1
      %s51 = scalar_select %p48, %s49, %s50
      %p54 = pneg %p48
      %p55 = scmp.eq.s32.totalorder %s13, 1
      %p56 = por %p54, %p55
      %p57 = scmp.ne.s32.totalorder %s49, %s52
      %p58 = scmp.eq.s32.totalorder %s13, 0
      %p59 = por %p57, %p58
      %p60 = scmp.ne.s32.totalorder %s49, %s52
      %p61 = scmp.eq.s32.totalorder %s18, 1
      %p62 = por %p60, %p61
      %p63 = scmp.ne.s32.totalorder %s52, %s53
      %p64 = scmp.eq.s32.totalorder %s18, 0
      %p65 = por %p63, %p64
      %p66 = scmp.ne.s32.totalorder %s52, %s53
      %p67 = scmp.eq.s32.totalorder %s19, 1
      %p68 = por %p66, %p67
      %p70 = scmp.ne.s32.totalorder %s53, %s69
      %p71 = scmp.eq.s32.totalorder %s19, 0
      %p72 = por %p70, %p71
      %p73 = scmp.le.s32.totalorder 1, %s13
      %p74 = scmp.lt.s32.totalorder %s13, 3
      %p75 = pnand %p73, %p74
      %p76 = pneg %p75
      // Predicated region
      $region9: #{tpu_custom_call.1} parent=5 // pred_check
        _
      $region10: #{tpu_custom_call.1} parent=5 // pred_check_branch
        %78 = sbr.rel (%p75) target = $region12
      $region11: #{tpu_custom_call.1} parent=5 // pred_region
        %s79 = ssub.s32 %s13, 1
      $region12: #{tpu_custom_call.1} parent=5 // pred_fallthru
        _
      %p80 = scmp.lt.s32.totalorder %s13, 2
      // Predicated region
      $region13: #{tpu_custom_call.1} parent=5 // pred_check
        %p81 = pneg %p80
      $region14: #{tpu_custom_call.1} parent=5 // pred_check_branch
        %83 = sbr.rel (%p81) target = $region16
      $region15: #{tpu_custom_call.1} parent=5 // pred_region
        // Predicated region
        $region17: #{tpu_custom_call.1} parent=15 // pred_check
          %p84 = pneg %p33
        $region18: #{tpu_custom_call.1} parent=15 // pred_check_branch
          %86 = sbr.rel (%p84) target = $region20
        $region19: #{tpu_custom_call.1} parent=15 // pred_region
          %s87 = sand.u32 %s23, 1
          %s88 = scalar_lea.sflag [#allocation3], %s87
          %s89 = sand.u32 %s23, 1
          %s90 = smul.addr %s89, 256
          %s91 = scalar_lea.vmem [#allocation2], %s90
          %s92 = smul.u32 32, %s13
          %94 = vsyncadd %s88, 0
          %s95 = smul.addr %s92, 8
          %s96 = scalar_lea.hbm %s0, %s95
          %s97 = sshll.u32 %s96, 4
          %s98 = int_to_ptr.hbm [resolvable:$true] %s97
          %s99 = sshll.u32 %s91, 4
          %s100 = int_to_ptr.vmem [resolvable:$true] %s99
          %105 = dma.hbm_to_vmem [thread:$0]  %s98, 4096, %s100, %s88, 128, 128, 8
        $region20: #{tpu_custom_call.1} parent=15 // pred_fallthru
          _
      $region16: #{tpu_custom_call.1} parent=5 // pred_fallthru
        _
      %p106 = scmp.le.s32.totalorder 1, %s13
      %p107 = scmp.lt.s32.totalorder %s13, 3
      %p108 = pnand %p106, %p107
      %p109 = pneg %p108
      // Predicated region
      $region21: #{tpu_custom_call.1} parent=5 // pred_check
        _
      $region22: #{tpu_custom_call.1} parent=5 // pred_check_branch
        %111 = sbr.rel (%p108) target = $region24
      $region23: #{tpu_custom_call.1} parent=5 // pred_region
        %s112 = ssub.s32 %s13, 1
        %s113 = sand.u32 %s26, 1
        %s114 = scalar_lea.sflag [#allocation3], %s113
        %s115 = sand.u32 %s26, 1
        %s116 = smul.addr %s115, 256
        %s117 = scalar_lea.vmem [#allocation2], %s116
        // Predicated region
        $region25: #{tpu_custom_call.1} parent=23 // pred_check
          %p118 = pneg %p39
        $region26: #{tpu_custom_call.1} parent=23 // pred_check_branch
          %120 = sbr.rel (%p118) target = $region28
        $region27: #{tpu_custom_call.1} parent=23 // pred_region
          %122 = dma.done %s114, 4096
        $region28: #{tpu_custom_call.1} parent=23 // pred_fallthru
          _
        %s123 = sand.u32 %s26, 1
        %s124 = scalar_lea.sflag [#allocation3], %s123
        %s125 = sand.u32 %s26, 1
        %s126 = smul.addr %s125, 256
        %s127 = scalar_lea.vmem [#allocation2], %s126
        %p128 = pneg %p39
        %p129 = pneg %p36
        %p130 = pneg %p65
        %p131 = pneg %p62
        %s132 = sand.u32 %s52, 1
        %s133 = scalar_lea.sflag [#allocation4], %s132
        %s134 = sand.u32 %s52, 1
        %s135 = smul.addr %s134, 128
        %s136 = scalar_lea.vmem [#allocation5], %s135
        %s137 = smul.u32 32, %s18
        %s138 = smul.u32 2, %s18
        %v139 = vld [vmem:[%s117] sm:$0xff]
        %v140 = vld [vmem:[%s117 + $0x8] sm:$0xff]
        %v141 = vld [vmem:[%s117 + $0x10] sm:$0xff]
        %v142 = vld [vmem:[%s117 + $0x18] sm:$0xff]
        %v143 = vld [vmem:[%s117 + $0x20] sm:$0xff]
        %v144 = vld [vmem:[%s117 + $0x28] sm:$0xff]
        %v145 = vld [vmem:[%s117 + $0x30] sm:$0xff]
        %v146 = vld [vmem:[%s117 + $0x38] sm:$0xff]
        %v147 = vld [vmem:[%s117 + $0x40] sm:$0xff]
        %v148 = vld [vmem:[%s117 + $0x48] sm:$0xff]
        %v149 = vld [vmem:[%s117 + $0x50] sm:$0xff]
        %v150 = vld [vmem:[%s117 + $0x58] sm:$0xff]
        %v151 = vld [vmem:[%s117 + $0x60] sm:$0xff]
        %v152 = vld [vmem:[%s117 + $0x68] sm:$0xff]
        %v153 = vld [vmem:[%s117 + $0x70] sm:$0xff]
        %v154 = vld [vmem:[%s117 + $0x78] sm:$0xff]
        %v155 = vld [vmem:[%s117 + $0x80] sm:$0xff]
        %v156 = vld [vmem:[%s117 + $0x88] sm:$0xff]
        %v157 = vld [vmem:[%s117 + $0x90] sm:$0xff]
        %v158 = vld [vmem:[%s117 + $0x98] sm:$0xff]
        %v159 = vld [vmem:[%s117 + $0xa0] sm:$0xff]
        %v160 = vld [vmem:[%s117 + $0xa8] sm:$0xff]
        %v161 = vld [vmem:[%s117 + $0xb0] sm:$0xff]
        %v162 = vld [vmem:[%s117 + $0xb8] sm:$0xff]
        %v163 = vld [vmem:[%s117 + $0xc0] sm:$0xff]
        %v164 = vld [vmem:[%s117 + $0xc8] sm:$0xff]
        %v165 = vld [vmem:[%s117 + $0xd0] sm:$0xff]
        %v166 = vld [vmem:[%s117 + $0xd8] sm:$0xff]
        %v167 = vld [vmem:[%s117 + $0xe0] sm:$0xff]
        %v168 = vld [vmem:[%s117 + $0xe8] sm:$0xff]
        %v169 = vld [vmem:[%s117 + $0xf0] sm:$0xff]
        %v170 = vld [vmem:[%s117 + $0xf8] sm:$0xff]
        %v171 = vmul.f32 %v139, %v139
        %v172 = vmul.f32 %v140, %v140
        %v173 = vmul.f32 %v141, %v141
        %v174 = vmul.f32 %v142, %v142
        %v175 = vmul.f32 %v143, %v143
        %v176 = vmul.f32 %v144, %v144
        %v177 = vmul.f32 %v145, %v145
        %v178 = vmul.f32 %v146, %v146
        %v179 = vmul.f32 %v147, %v147
        %v180 = vmul.f32 %v148, %v148
        %v181 = vmul.f32 %v149, %v149
        %v182 = vmul.f32 %v150, %v150
        %v183 = vmul.f32 %v151, %v151
        %v184 = vmul.f32 %v152, %v152
        %v185 = vmul.f32 %v153, %v153
        %v186 = vmul.f32 %v154, %v154
        %v187 = vmul.f32 %v155, %v155
        %v188 = vmul.f32 %v156, %v156
        %v189 = vmul.f32 %v157, %v157
        %v190 = vmul.f32 %v158, %v158
        %v191 = vmul.f32 %v159, %v159
        %v192 = vmul.f32 %v160, %v160
        %v193 = vmul.f32 %v161, %v161
        %v194 = vmul.f32 %v162, %v162
        %v195 = vmul.f32 %v163, %v163
        %v196 = vmul.f32 %v164, %v164
        %v197 = vmul.f32 %v165, %v165
        %v198 = vmul.f32 %v166, %v166
        %v199 = vmul.f32 %v167, %v167
        %v200 = vmul.f32 %v168, %v168
        %v201 = vmul.f32 %v169, %v169
        %v202 = vmul.f32 %v170, %v170
        %203 = vadd.xlane.f32.xlu0 %v171
        %v204 = vpop.xlane.xlu0 %203
        %205 = vadd.xlane.f32.xlu0 %v172
        %v206 = vpop.xlane.xlu0 %205
        %207 = vadd.xlane.f32.xlu0 %v173
        %v208 = vpop.xlane.xlu0 %207
        %209 = vadd.xlane.f32.xlu0 %v174
        %v210 = vpop.xlane.xlu0 %209
        %211 = vadd.xlane.f32.xlu0 %v175
        %v212 = vpop.xlane.xlu0 %211
        %213 = vadd.xlane.f32.xlu0 %v176
        %v214 = vpop.xlane.xlu0 %213
        %215 = vadd.xlane.f32.xlu0 %v177
        %v216 = vpop.xlane.xlu0 %215
        %217 = vadd.xlane.f32.xlu0 %v178
        %v218 = vpop.xlane.xlu0 %217
        %219 = vadd.xlane.f32.xlu0 %v179
        %v220 = vpop.xlane.xlu0 %219
        %221 = vadd.xlane.f32.xlu0 %v180
        %v222 = vpop.xlane.xlu0 %221
        %223 = vadd.xlane.f32.xlu0 %v181
        %v224 = vpop.xlane.xlu0 %223
        %225 = vadd.xlane.f32.xlu0 %v182
        %v226 = vpop.xlane.xlu0 %225
        %227 = vadd.xlane.f32.xlu0 %v183
        %v228 = vpop.xlane.xlu0 %227
        %229 = vadd.xlane.f32.xlu0 %v184
        %v230 = vpop.xlane.xlu0 %229
        %231 = vadd.xlane.f32.xlu0 %v185
        %v232 = vpop.xlane.xlu0 %231
        %233 = vadd.xlane.f32.xlu0 %v186
        %v234 = vpop.xlane.xlu0 %233
        %235 = vadd.xlane.f32.xlu0 %v187
        %v236 = vpop.xlane.xlu0 %235
        %237 = vadd.xlane.f32.xlu0 %v188
        %v238 = vpop.xlane.xlu0 %237
        %239 = vadd.xlane.f32.xlu0 %v189
        %v240 = vpop.xlane.xlu0 %239
        %241 = vadd.xlane.f32.xlu0 %v190
        %v242 = vpop.xlane.xlu0 %241
        %243 = vadd.xlane.f32.xlu0 %v191
        %v244 = vpop.xlane.xlu0 %243
        %245 = vadd.xlane.f32.xlu0 %v192
        %v246 = vpop.xlane.xlu0 %245
        %247 = vadd.xlane.f32.xlu0 %v193
        %v248 = vpop.xlane.xlu0 %247
        %249 = vadd.xlane.f32.xlu0 %v194
        %v250 = vpop.xlane.xlu0 %249
        %251 = vadd.xlane.f32.xlu0 %v195
        %v252 = vpop.xlane.xlu0 %251
        %253 = vadd.xlane.f32.xlu0 %v196
        %v254 = vpop.xlane.xlu0 %253
        %255 = vadd.xlane.f32.xlu0 %v197
        %v256 = vpop.xlane.xlu0 %255
        %257 = vadd.xlane.f32.xlu0 %v198
        %v258 = vpop.xlane.xlu0 %257
        %259 = vadd.xlane.f32.xlu0 %v199
        %v260 = vpop.xlane.xlu0 %259
        %261 = vadd.xlane.f32.xlu0 %v200
        %v262 = vpop.xlane.xlu0 %261
        %263 = vadd.xlane.f32.xlu0 %v201
        %v264 = vpop.xlane.xlu0 %263
        %265 = vadd.xlane.f32.xlu0 %v202
        %v266 = vpop.xlane.xlu0 %265
        %v267 = vmax.f32 %v204, 1e-24
        %v268 = vmax.f32 %v206, 1e-24
        %v269 = vmax.f32 %v208, 1e-24
        %v270 = vmax.f32 %v210, 1e-24
        %v271 = vmax.f32 %v212, 1e-24
        %v272 = vmax.f32 %v214, 1e-24
        %v273 = vmax.f32 %v216, 1e-24
        %v274 = vmax.f32 %v218, 1e-24
        %v275 = vmax.f32 %v220, 1e-24
        %v276 = vmax.f32 %v222, 1e-24
        %v277 = vmax.f32 %v224, 1e-24
        %v278 = vmax.f32 %v226, 1e-24
        %v279 = vmax.f32 %v228, 1e-24
        %v280 = vmax.f32 %v230, 1e-24
        %v281 = vmax.f32 %v232, 1e-24
        %v282 = vmax.f32 %v234, 1e-24
        %v283 = vmax.f32 %v236, 1e-24
        %v284 = vmax.f32 %v238, 1e-24
        %v285 = vmax.f32 %v240, 1e-24
        %v286 = vmax.f32 %v242, 1e-24
        %v287 = vmax.f32 %v244, 1e-24
        %v288 = vmax.f32 %v246, 1e-24
        %v289 = vmax.f32 %v248, 1e-24
        %v290 = vmax.f32 %v250, 1e-24
        %v291 = vmax.f32 %v252, 1e-24
        %v292 = vmax.f32 %v254, 1e-24
        %v293 = vmax.f32 %v256, 1e-24
        %v294 = vmax.f32 %v258, 1e-24
        %v295 = vmax.f32 %v260, 1e-24
        %v296 = vmax.f32 %v262, 1e-24
        %v297 = vmax.f32 %v264, 1e-24
        %v298 = vmax.f32 %v266, 1e-24
        %v299 = vrsqrt.pop %v267
        %v300 = vmul.f32 %v299, %v267
        %v301 = vmul.f32 %v300, %v299
        %v302 = vmul.f32 0.5, %v301
        %v303 = vsub.f32 1.5, %v302
        %v304 = vmul.f32 %v299, %v303
        %vm305 = vweird.f32 %v267
        %vm306 = vweird.f32 %v299
        %vm307 = vmor %vm305, %vm306
        %v308 = vsel %vm307, %v299, %v304
        %v309 = vrsqrt.pop %v268
        %v310 = vmul.f32 %v309, %v268
        %v311 = vmul.f32 %v310, %v309
        %v312 = vmul.f32 0.5, %v311
        %v313 = vsub.f32 1.5, %v312
        %v314 = vmul.f32 %v309, %v313
        %vm315 = vweird.f32 %v268
        %vm316 = vweird.f32 %v309
        %vm317 = vmor %vm315, %vm316
        %v318 = vsel %vm317, %v309, %v314
        %v319 = vrsqrt.pop %v269
        %v320 = vmul.f32 %v319, %v269
        %v321 = vmul.f32 %v320, %v319
        %v322 = vmul.f32 0.5, %v321
        %v323 = vsub.f32 1.5, %v322
        %v324 = vmul.f32 %v319, %v323
        %vm325 = vweird.f32 %v269
        %vm326 = vweird.f32 %v319
        %vm327 = vmor %vm325, %vm326
        %v328 = vsel %vm327, %v319, %v324
        %v329 = vrsqrt.pop %v270
        %v330 = vmul.f32 %v329, %v270
        %v331 = vmul.f32 %v330, %v329
        %v332 = vmul.f32 0.5, %v331
        %v333 = vsub.f32 1.5, %v332
        %v334 = vmul.f32 %v329, %v333
        %vm335 = vweird.f32 %v270
        %vm336 = vweird.f32 %v329
        %vm337 = vmor %vm335, %vm336
        %v338 = vsel %vm337, %v329, %v334
        %v339 = vrsqrt.pop %v271
        %v340 = vmul.f32 %v339, %v271
        %v341 = vmul.f32 %v340, %v339
        %v342 = vmul.f32 0.5, %v341
        %v343 = vsub.f32 1.5, %v342
        %v344 = vmul.f32 %v339, %v343
        %vm345 = vweird.f32 %v271
        %vm346 = vweird.f32 %v339
        %vm347 = vmor %vm345, %vm346
        %v348 = vsel %vm347, %v339, %v344
        %v349 = vrsqrt.pop %v272
        %v350 = vmul.f32 %v349, %v272
        %v351 = vmul.f32 %v350, %v349
        %v352 = vmul.f32 0.5, %v351
        %v353 = vsub.f32 1.5, %v352
        %v354 = vmul.f32 %v349, %v353
        %vm355 = vweird.f32 %v272
        %vm356 = vweird.f32 %v349
        %vm357 = vmor %vm355, %vm356
        %v358 = vsel %vm357, %v349, %v354
        %v359 = vrsqrt.pop %v273
        %v360 = vmul.f32 %v359, %v273
        %v361 = vmul.f32 %v360, %v359
        %v362 = vmul.f32 0.5, %v361
        %v363 = vsub.f32 1.5, %v362
        %v364 = vmul.f32 %v359, %v363
        %vm365 = vweird.f32 %v273
        %vm366 = vweird.f32 %v359
        %vm367 = vmor %vm365, %vm366
        %v368 = vsel %vm367, %v359, %v364
        %v369 = vrsqrt.pop %v274
        %v370 = vmul.f32 %v369, %v274
        %v371 = vmul.f32 %v370, %v369
        %v372 = vmul.f32 0.5, %v371
        %v373 = vsub.f32 1.5, %v372
        %v374 = vmul.f32 %v369, %v373
        %vm375 = vweird.f32 %v274
        %vm376 = vweird.f32 %v369
        %vm377 = vmor %vm375, %vm376
        %v378 = vsel %vm377, %v369, %v374
        %v379 = vrsqrt.pop %v275
        %v380 = vmul.f32 %v379, %v275
        %v381 = vmul.f32 %v380, %v379
        %v382 = vmul.f32 0.5, %v381
        %v383 = vsub.f32 1.5, %v382
        %v384 = vmul.f32 %v379, %v383
        %vm385 = vweird.f32 %v275
        %vm386 = vweird.f32 %v379
        %vm387 = vmor %vm385, %vm386
        %v388 = vsel %vm387, %v379, %v384
        %v389 = vrsqrt.pop %v276
        %v390 = vmul.f32 %v389, %v276
        %v391 = vmul.f32 %v390, %v389
        %v392 = vmul.f32 0.5, %v391
        %v393 = vsub.f32 1.5, %v392
        %v394 = vmul.f32 %v389, %v393
        %vm395 = vweird.f32 %v276
        %vm396 = vweird.f32 %v389
        %vm397 = vmor %vm395, %vm396
        %v398 = vsel %vm397, %v389, %v394
        %v399 = vrsqrt.pop %v277
        %v400 = vmul.f32 %v399, %v277
        %v401 = vmul.f32 %v400, %v399
        %v402 = vmul.f32 0.5, %v401
        %v403 = vsub.f32 1.5, %v402
        %v404 = vmul.f32 %v399, %v403
        %vm405 = vweird.f32 %v277
        %vm406 = vweird.f32 %v399
        %vm407 = vmor %vm405, %vm406
        %v408 = vsel %vm407, %v399, %v404
        %v409 = vrsqrt.pop %v278
        %v410 = vmul.f32 %v409, %v278
        %v411 = vmul.f32 %v410, %v409
        %v412 = vmul.f32 0.5, %v411
        %v413 = vsub.f32 1.5, %v412
        %v414 = vmul.f32 %v409, %v413
        %vm415 = vweird.f32 %v278
        %vm416 = vweird.f32 %v409
        %vm417 = vmor %vm415, %vm416
        %v418 = vsel %vm417, %v409, %v414
        %v419 = vrsqrt.pop %v279
        %v420 = vmul.f32 %v419, %v279
        %v421 = vmul.f32 %v420, %v419
        %v422 = vmul.f32 0.5, %v421
        %v423 = vsub.f32 1.5, %v422
        %v424 = vmul.f32 %v419, %v423
        %vm425 = vweird.f32 %v279
        %vm426 = vweird.f32 %v419
        %vm427 = vmor %vm425, %vm426
        %v428 = vsel %vm427, %v419, %v424
        %v429 = vrsqrt.pop %v280
        %v430 = vmul.f32 %v429, %v280
        %v431 = vmul.f32 %v430, %v429
        %v432 = vmul.f32 0.5, %v431
        %v433 = vsub.f32 1.5, %v432
        %v434 = vmul.f32 %v429, %v433
        %vm435 = vweird.f32 %v280
        %vm436 = vweird.f32 %v429
        %vm437 = vmor %vm435, %vm436
        %v438 = vsel %vm437, %v429, %v434
        %v439 = vrsqrt.pop %v281
        %v440 = vmul.f32 %v439, %v281
        %v441 = vmul.f32 %v440, %v439
        %v442 = vmul.f32 0.5, %v441
        %v443 = vsub.f32 1.5, %v442
        %v444 = vmul.f32 %v439, %v443
        %vm445 = vweird.f32 %v281
        %vm446 = vweird.f32 %v439
        %vm447 = vmor %vm445, %vm446
        %v448 = vsel %vm447, %v439, %v444
        %v449 = vrsqrt.pop %v282
        %v450 = vmul.f32 %v449, %v282
        %v451 = vmul.f32 %v450, %v449
        %v452 = vmul.f32 0.5, %v451
        %v453 = vsub.f32 1.5, %v452
        %v454 = vmul.f32 %v449, %v453
        %vm455 = vweird.f32 %v282
        %vm456 = vweird.f32 %v449
        %vm457 = vmor %vm455, %vm456
        %v458 = vsel %vm457, %v449, %v454
        %v459 = vrsqrt.pop %v283
        %v460 = vmul.f32 %v459, %v283
        %v461 = vmul.f32 %v460, %v459
        %v462 = vmul.f32 0.5, %v461
        %v463 = vsub.f32 1.5, %v462
        %v464 = vmul.f32 %v459, %v463
        %vm465 = vweird.f32 %v283
        %vm466 = vweird.f32 %v459
        %vm467 = vmor %vm465, %vm466
        %v468 = vsel %vm467, %v459, %v464
        %v469 = vrsqrt.pop %v284
        %v470 = vmul.f32 %v469, %v284
        %v471 = vmul.f32 %v470, %v469
        %v472 = vmul.f32 0.5, %v471
        %v473 = vsub.f32 1.5, %v472
        %v474 = vmul.f32 %v469, %v473
        %vm475 = vweird.f32 %v284
        %vm476 = vweird.f32 %v469
        %vm477 = vmor %vm475, %vm476
        %v478 = vsel %vm477, %v469, %v474
        %v479 = vrsqrt.pop %v285
        %v480 = vmul.f32 %v479, %v285
        %v481 = vmul.f32 %v480, %v479
        %v482 = vmul.f32 0.5, %v481
        %v483 = vsub.f32 1.5, %v482
        %v484 = vmul.f32 %v479, %v483
        %vm485 = vweird.f32 %v285
        %vm486 = vweird.f32 %v479
        %vm487 = vmor %vm485, %vm486
        %v488 = vsel %vm487, %v479, %v484
        %v489 = vrsqrt.pop %v286
        %v490 = vmul.f32 %v489, %v286
        %v491 = vmul.f32 %v490, %v489
        %v492 = vmul.f32 0.5, %v491
        %v493 = vsub.f32 1.5, %v492
        %v494 = vmul.f32 %v489, %v493
        %vm495 = vweird.f32 %v286
        %vm496 = vweird.f32 %v489
        %vm497 = vmor %vm495, %vm496
        %v498 = vsel %vm497, %v489, %v494
        %v499 = vrsqrt.pop %v287
        %v500 = vmul.f32 %v499, %v287
        %v501 = vmul.f32 %v500, %v499
        %v502 = vmul.f32 0.5, %v501
        %v503 = vsub.f32 1.5, %v502
        %v504 = vmul.f32 %v499, %v503
        %vm505 = vweird.f32 %v287
        %vm506 = vweird.f32 %v499
        %vm507 = vmor %vm505, %vm506
        %v508 = vsel %vm507, %v499, %v504
        %v509 = vrsqrt.pop %v288
        %v510 = vmul.f32 %v509, %v288
        %v511 = vmul.f32 %v510, %v509
        %v512 = vmul.f32 0.5, %v511
        %v513 = vsub.f32 1.5, %v512
        %v514 = vmul.f32 %v509, %v513
        %vm515 = vweird.f32 %v288
        %vm516 = vweird.f32 %v509
        %vm517 = vmor %vm515, %vm516
        %v518 = vsel %vm517, %v509, %v514
        %v519 = vrsqrt.pop %v289
        %v520 = vmul.f32 %v519, %v289
        %v521 = vmul.f32 %v520, %v519
        %v522 = vmul.f32 0.5, %v521
        %v523 = vsub.f32 1.5, %v522
        %v524 = vmul.f32 %v519, %v523
        %vm525 = vweird.f32 %v289
        %vm526 = vweird.f32 %v519
        %vm527 = vmor %vm525, %vm526
        %v528 = vsel %vm527, %v519, %v524
        %v529 = vrsqrt.pop %v290
        %v530 = vmul.f32 %v529, %v290
        %v531 = vmul.f32 %v530, %v529
        %v532 = vmul.f32 0.5, %v531
        %v533 = vsub.f32 1.5, %v532
        %v534 = vmul.f32 %v529, %v533
        %vm535 = vweird.f32 %v290
        %vm536 = vweird.f32 %v529
        %vm537 = vmor %vm535, %vm536
        %v538 = vsel %vm537, %v529, %v534
        %v539 = vrsqrt.pop %v291
        %v540 = vmul.f32 %v539, %v291
        %v541 = vmul.f32 %v540, %v539
        %v542 = vmul.f32 0.5, %v541
        %v543 = vsub.f32 1.5, %v542
        %v544 = vmul.f32 %v539, %v543
        %vm545 = vweird.f32 %v291
        %vm546 = vweird.f32 %v539
        %vm547 = vmor %vm545, %vm546
        %v548 = vsel %vm547, %v539, %v544
        %v549 = vrsqrt.pop %v292
        %v550 = vmul.f32 %v549, %v292
        %v551 = vmul.f32 %v550, %v549
        %v552 = vmul.f32 0.5, %v551
        %v553 = vsub.f32 1.5, %v552
        %v554 = vmul.f32 %v549, %v553
        %vm555 = vweird.f32 %v292
        %vm556 = vweird.f32 %v549
        %vm557 = vmor %vm555, %vm556
        %v558 = vsel %vm557, %v549, %v554
        %v559 = vrsqrt.pop %v293
        %v560 = vmul.f32 %v559, %v293
        %v561 = vmul.f32 %v560, %v559
        %v562 = vmul.f32 0.5, %v561
        %v563 = vsub.f32 1.5, %v562
        %v564 = vmul.f32 %v559, %v563
        %vm565 = vweird.f32 %v293
        %vm566 = vweird.f32 %v559
        %vm567 = vmor %vm565, %vm566
        %v568 = vsel %vm567, %v559, %v564
        %v569 = vrsqrt.pop %v294
        %v570 = vmul.f32 %v569, %v294
        %v571 = vmul.f32 %v570, %v569
        %v572 = vmul.f32 0.5, %v571
        %v573 = vsub.f32 1.5, %v572
        %v574 = vmul.f32 %v569, %v573
        %vm575 = vweird.f32 %v294
        %vm576 = vweird.f32 %v569
        %vm577 = vmor %vm575, %vm576
        %v578 = vsel %vm577, %v569, %v574
        %v579 = vrsqrt.pop %v295
        %v580 = vmul.f32 %v579, %v295
        %v581 = vmul.f32 %v580, %v579
        %v582 = vmul.f32 0.5, %v581
        %v583 = vsub.f32 1.5, %v582
        %v584 = vmul.f32 %v579, %v583
        %vm585 = vweird.f32 %v295
        %vm586 = vweird.f32 %v579
        %vm587 = vmor %vm585, %vm586
        %v588 = vsel %vm587, %v579, %v584
        %v589 = vrsqrt.pop %v296
        %v590 = vmul.f32 %v589, %v296
        %v591 = vmul.f32 %v590, %v589
        %v592 = vmul.f32 0.5, %v591
        %v593 = vsub.f32 1.5, %v592
        %v594 = vmul.f32 %v589, %v593
        %vm595 = vweird.f32 %v296
        %vm596 = vweird.f32 %v589
        %vm597 = vmor %vm595, %vm596
        %v598 = vsel %vm597, %v589, %v594
        %v599 = vrsqrt.pop %v297
        %v600 = vmul.f32 %v599, %v297
        %v601 = vmul.f32 %v600, %v599
        %v602 = vmul.f32 0.5, %v601
        %v603 = vsub.f32 1.5, %v602
        %v604 = vmul.f32 %v599, %v603
        %vm605 = vweird.f32 %v297
        %vm606 = vweird.f32 %v599
        %vm607 = vmor %vm605, %vm606
        %v608 = vsel %vm607, %v599, %v604
        %v609 = vrsqrt.pop %v298
        %v610 = vmul.f32 %v609, %v298
        %v611 = vmul.f32 %v610, %v609
        %v612 = vmul.f32 0.5, %v611
        %v613 = vsub.f32 1.5, %v612
        %v614 = vmul.f32 %v609, %v613
        %vm615 = vweird.f32 %v298
        %vm616 = vweird.f32 %v609
        %vm617 = vmor %vm615, %vm616
        %v618 = vsel %vm617, %v609, %v614
        %v619 = vmul.f32 %v139, %v308
        %v620 = vmul.f32 %v140, %v318
        %v621 = vmul.f32 %v141, %v328
        %v622 = vmul.f32 %v142, %v338
        %v623 = vmul.f32 %v143, %v348
        %v624 = vmul.f32 %v144, %v358
        %v625 = vmul.f32 %v145, %v368
        %v626 = vmul.f32 %v146, %v378
        %v627 = vmul.f32 %v147, %v388
        %v628 = vmul.f32 %v148, %v398
        %v629 = vmul.f32 %v149, %v408
        %v630 = vmul.f32 %v150, %v418
        %v631 = vmul.f32 %v151, %v428
        %v632 = vmul.f32 %v152, %v438
        %v633 = vmul.f32 %v153, %v448
        %v634 = vmul.f32 %v154, %v458
        %v635 = vmul.f32 %v155, %v468
        %v636 = vmul.f32 %v156, %v478
        %v637 = vmul.f32 %v157, %v488
        %v638 = vmul.f32 %v158, %v498
        %v639 = vmul.f32 %v159, %v508
        %v640 = vmul.f32 %v160, %v518
        %v641 = vmul.f32 %v161, %v528
        %v642 = vmul.f32 %v162, %v538
        %v643 = vmul.f32 %v163, %v548
        %v644 = vmul.f32 %v164, %v558
        %v645 = vmul.f32 %v165, %v568
        %v646 = vmul.f32 %v166, %v578
        %v647 = vmul.f32 %v167, %v588
        %v648 = vmul.f32 %v168, %v598
        %v649 = vmul.f32 %v169, %v608
        %v650 = vmul.f32 %v170, %v618
        %651 = vxpose.xlu0.b32.start [1/16] %v619, 128
        %652 = vxpose.xlu0.b32.cont [2/16] %v620, 128
        %653 = vxpose.xlu0.b32.cont [3/16] %v621, 128
        %654 = vxpose.xlu0.b32.cont [4/16] %v622, 128
        %655 = vxpose.xlu0.b32.cont [5/16] %v623, 128
        %656 = vxpose.xlu0.b32.cont [6/16] %v624, 128
        %657 = vxpose.xlu0.b32.cont [7/16] %v625, 128
        %658 = vxpose.xlu0.b32.cont [8/16] %v626, 128
        %659 = vxpose.xlu0.b32.cont [9/16] %v627, 128
        %660 = vxpose.xlu0.b32.cont [10/16] %v628, 128
        %661 = vxpose.xlu0.b32.cont [11/16] %v629, 128
        %662 = vxpose.xlu0.b32.cont [12/16] %v630, 128
        %663 = vxpose.xlu0.b32.cont [13/16] %v631, 128
        %664 = vxpose.xlu0.b32.cont [14/16] %v632, 128
        %665 = vxpose.xlu0.b32.cont [15/16] %v633, 128
        %666 = vxpose.xlu0.b32.end [16/16] %v634, 128
        %v667 = vpop.trf.xlu0
        %v668 = vpop.trf.xlu0
        %v669 = vpop.trf.xlu0
        %v670 = vpop.trf.xlu0
        %v671 = vpop.trf.xlu0
        %v672 = vpop.trf.xlu0
        %v673 = vpop.trf.xlu0
        %v674 = vpop.trf.xlu0
        %v675 = vpop.trf.xlu0
        %v676 = vpop.trf.xlu0
        %v677 = vpop.trf.xlu0
        %v678 = vpop.trf.xlu0
        %v679 = vpop.trf.xlu0
        %v680 = vpop.trf.xlu0
        %v681 = vpop.trf.xlu0
        %v682 = vpop.trf.xlu0
        %683 = vxpose.xlu0.b32.start [1/16] %v635, 128
        %684 = vxpose.xlu0.b32.cont [2/16] %v636, 128
        %685 = vxpose.xlu0.b32.cont [3/16] %v637, 128
        %686 = vxpose.xlu0.b32.cont [4/16] %v638, 128
        %687 = vxpose.xlu0.b32.cont [5/16] %v639, 128
        %688 = vxpose.xlu0.b32.cont [6/16] %v640, 128
        %689 = vxpose.xlu0.b32.cont [7/16] %v641, 128
        %690 = vxpose.xlu0.b32.cont [8/16] %v642, 128
        %691 = vxpose.xlu0.b32.cont [9/16] %v643, 128
        %692 = vxpose.xlu0.b32.cont [10/16] %v644, 128
        %693 = vxpose.xlu0.b32.cont [11/16] %v645, 128
        %694 = vxpose.xlu0.b32.cont [12/16] %v646, 128
        %695 = vxpose.xlu0.b32.cont [13/16] %v647, 128
        %696 = vxpose.xlu0.b32.cont [14/16] %v648, 128
        %697 = vxpose.xlu0.b32.cont [15/16] %v649, 128
        %698 = vxpose.xlu0.b32.end [16/16] %v650, 128
        %v699 = vpop.trf.xlu0
        %v700 = vpop.trf.xlu0
        %v701 = vpop.trf.xlu0
        %v702 = vpop.trf.xlu0
        %v703 = vpop.trf.xlu0
        %v704 = vpop.trf.xlu0
        %v705 = vpop.trf.xlu0
        %v706 = vpop.trf.xlu0
        %v707 = vpop.trf.xlu0
        %v708 = vpop.trf.xlu0
        %v709 = vpop.trf.xlu0
        %v710 = vpop.trf.xlu0
        %v711 = vpop.trf.xlu0
        %v712 = vpop.trf.xlu0
        %v713 = vpop.trf.xlu0
        %v714 = vpop.trf.xlu0
        %v715 = vpack.c.bf16 %v699, %v667
        %v716 = vpack.c.bf16 %v700, %v668
        %v717 = vpack.c.bf16 %v701, %v669
        %v718 = vpack.c.bf16 %v702, %v670
        %v719 = vpack.c.bf16 %v703, %v671
        %v720 = vpack.c.bf16 %v704, %v672
        %v721 = vpack.c.bf16 %v705, %v673
        %v722 = vpack.c.bf16 %v706, %v674
        %v723 = vpack.c.bf16 %v707, %v675
        %v724 = vpack.c.bf16 %v708, %v676
        %v725 = vpack.c.bf16 %v709, %v677
        %v726 = vpack.c.bf16 %v710, %v678
        %v727 = vpack.c.bf16 %v711, %v679
        %v728 = vpack.c.bf16 %v712, %v680
        %v729 = vpack.c.bf16 %v713, %v681
        %v730 = vpack.c.bf16 %v714, %v682
        %731 = vst [vmem:[%s136] sm:$0xff] %v715
        %732 = vst [vmem:[%s136 + $0x8] sm:$0xff] %v716
        %733 = vst [vmem:[%s136 + $0x10] sm:$0xff] %v717
        %734 = vst [vmem:[%s136 + $0x18] sm:$0xff] %v718
        %735 = vst [vmem:[%s136 + $0x20] sm:$0xff] %v719
        %736 = vst [vmem:[%s136 + $0x28] sm:$0xff] %v720
        %737 = vst [vmem:[%s136 + $0x30] sm:$0xff] %v721
        %738 = vst [vmem:[%s136 + $0x38] sm:$0xff] %v722
        %739 = vst [vmem:[%s136 + $0x40] sm:$0xff] %v723
        %740 = vst [vmem:[%s136 + $0x48] sm:$0xff] %v724
        %741 = vst [vmem:[%s136 + $0x50] sm:$0xff] %v725
        %742 = vst [vmem:[%s136 + $0x58] sm:$0xff] %v726
        %743 = vst [vmem:[%s136 + $0x60] sm:$0xff] %v727
        %744 = vst [vmem:[%s136 + $0x68] sm:$0xff] %v728
        %745 = vst [vmem:[%s136 + $0x70] sm:$0xff] %v729
        %746 = vst [vmem:[%s136 + $0x78] sm:$0xff] %v730
        %s747 = sand.u32 %s52, 1
        %s748 = scalar_lea.sflag [#allocation4], %s747
        %s749 = sand.u32 %s52, 1
        %s750 = smul.addr %s749, 128
        %s751 = scalar_lea.vmem [#allocation5], %s750
        // Predicated region
        $region29: #{tpu_custom_call.1} parent=23 // pred_check
          %p752 = pneg %p62
        $region30: #{tpu_custom_call.1} parent=23 // pred_check_branch
          %754 = sbr.rel (%p752) target = $region32
        $region31: #{tpu_custom_call.1} parent=23 // pred_region
          %s755 = smul.u32 2, %s18
          %757 = vsyncadd %s748, 0
          %s758 = smul.addr %s755, 4
          %s759 = scalar_lea.hbm %s1, %s758
          %s760 = sshll.u32 %s751, 4
          %s761 = int_to_ptr.vmem [resolvable:$true] %s760
          %s762 = sshll.u32 %s759, 4
          %s763 = int_to_ptr.hbm [resolvable:$true] %s762
          %768 = dma.vmem_to_hbm [thread:$0]  %s761, 2048, %s763, %s748, 128, 256, 8
        $region32: #{tpu_custom_call.1} parent=23 // pred_fallthru
          _
      $region24: #{tpu_custom_call.1} parent=5 // pred_fallthru
        _
      %p769 = scmp.le.s32.totalorder 2, %s13
      // Predicated region
      $region33: #{tpu_custom_call.1} parent=5 // pred_check
        %p770 = pneg %p769
      $region34: #{tpu_custom_call.1} parent=5 // pred_check_branch
        %772 = sbr.rel (%p770) target = $region36
      $region35: #{tpu_custom_call.1} parent=5 // pred_region
        %s773 = ssub.s32 %s13, 2
        // Predicated region
        $region37: #{tpu_custom_call.1} parent=35 // pred_check
          %p774 = pneg %p68
        $region38: #{tpu_custom_call.1} parent=35 // pred_check_branch
          %776 = sbr.rel (%p774) target = $region40
        $region39: #{tpu_custom_call.1} parent=35 // pred_region
          %s777 = sand.u32 %s53, 1
          %s778 = scalar_lea.sflag [#allocation4], %s777
          %s779 = sand.u32 %s53, 1
          %s780 = smul.addr %s779, 128
          %s781 = scalar_lea.vmem [#allocation5], %s780
          %783 = dma.done %s778, 2048
        $region40: #{tpu_custom_call.1} parent=35 // pred_fallthru
          _
      $region36: #{tpu_custom_call.1} parent=5 // pred_fallthru
        _
    $region6: #{tpu_custom_call.1} parent=1 // loop_footer
      %s17 = sadd.s32 1, %s13
    $region7: #{tpu_custom_call.1} parent=1 // loop_footer_branch
      %12 = sbr.rel target = $region3
    $region8: #{tpu_custom_call.1} parent=1 // loop_exit
      _
    %784 = vsyncpa [#allocation3], 1
    %s785 = scalar_lea.sflag [#allocation3], 1
    %786 = vsyncpa %s785, 1
    %787 = vsyncpa [#allocation4], 1
    %s788 = scalar_lea.sflag [#allocation4], 1
    %789 = vsyncpa %s788, 1

</llo_original>
